<compile_context>
chip_gen: v6e
topology: v6e:2x2x1
jax: 0.10.0
libtpu: 0.0.40
codegen_flags: <defaults>
</compile_context>

<pallas_src>
import functools

import jax
import jax.numpy as jnp
from jax import lax
from jax.experimental import pallas as pl
from jax.experimental.pallas import tpu as pltpu


def _conv3x3_kernel(w_ref, b_ref, x_ref, o_ref, *, H, W):
    """3x3 'same' conv, 1-in/1-out channel, images flattened to (Nb, H*W).

    w_ref : SMEM (9,)  f32  row-major 3x3 weights
    b_ref : SMEM (1,)  f32  bias
    x_ref : VMEM (Nb, H*W)  input block
    o_ref : VMEM (Nb, H*W)  output block

    The flattened last dim (H*W) is the lane axis.  All neighbor taps are
    pltpu.roll rotations; wrap-around is cancelled by row/column boundary
    masks so the result matches zero padding (padding=1).
    """
    Nb, L = o_ref.shape

    x = x_ref[...].astype(jnp.float32)

    # Scalar weights / bias from SMEM, hoisted once.
    w = [w_ref[k] for k in range(9)]
    b = b_ref[0]

    lane = lax.broadcasted_iota(jnp.int32, (Nb, L), 1)
    col = lane % W                                   # j index within a row
    zero = jnp.zeros((Nb, L), jnp.float32)

    # Column taps (shared by all three kernel rows):
    #   xm[p] = x(i, j-1), xp[p] = x(i, j+1), zero outside the image.
    xm = jnp.where(col >= 1,
                   pltpu.roll(x, shift=1, axis=1), zero)
    xp = jnp.where(col <= W - 2,
                   pltpu.roll(x, shift=(L - 1) % L, axis=1), zero)

    # Weighted per-kernel-row sums, still in the source row's coordinates.
    s_top = w[0] * xm + w[1] * x + w[2] * xp            # contributes from row i-1
    s_mid = w[3] * xm + (w[4] * x + b) + w[5] * xp      # row i (bias folded in)
    s_bot = w[6] * xm + w[7] * x + w[8] * xp            # contributes from row i+1

    # Row shifts (+/- one image row == +/- W lanes) with boundary masks.
    acc = s_mid
    acc = acc + jnp.where(lane >= W,
                          pltpu.roll(s_top, shift=W % L, axis=1), zero)
    acc = acc + jnp.where(lane < L - W,
                          pltpu.roll(s_bot, shift=(L - W) % L, axis=1), zero)

    o_ref[...] = acc.astype(o_ref.dtype)


def _pick_batch_block(N, row_bytes, target_bytes=1 << 20):
    """Divisor-of-N batch block, multiple of 8 sublanes, ~target_bytes sized.

    Tiny problems (a few KiB) stay in a single grid step; otherwise blocks are
    sized so the auto-pipeline has >= 2 steps to overlap DMA with compute.
    """
    total = N * row_bytes
    if total <= 2 * target_bytes or N < 16:
        return N
    want = max(8, int(target_bytes // max(row_bytes, 1)))
    want = min(N, (want // 8) * 8)
    for nb in range(want, 7, -8):          # multiples of 8 that divide N
        if N % nb == 0:
            return nb
    return N                               # no suitable divisor: whole batch


def conv2d_3x3_same(x_nchw, weight, bias, *, target_block_bytes=1 << 20):
    """DummyModel.forward: Conv2d(1, 1, kernel_size=3, padding=1).

    x_nchw: (N, 1, H, W); weight: (3, 3) or (1, 1, 3, 3); bias: (1,).
    Returns (N, 1, H, W).
    """
    N, C, H, W = x_nchw.shape
    assert C == 1, "DummyModel conv has a single input channel"
    L = H * W

    # Metadata-only reshapes (no extra HBM traffic).
    x = x_nchw.reshape(N, L)
    w_flat = jnp.asarray(weight, jnp.float32).reshape(9)
    b = jnp.asarray(bias, jnp.float32).reshape(1)

    Nb = _pick_batch_block(N, L * x.dtype.itemsize, target_block_bytes)
    grid_n = N // Nb

    kernel = functools.partial(_conv3x3_kernel, H=H, W=W)

    out = pl.pallas_call(
        kernel,
        out_shape=jax.ShapeDtypeStruct((N, L), x_nchw.dtype),
        grid_spec=pltpu.PrefetchScalarGridSpec(
            num_scalar_prefetch=0,
            grid=(grid_n,),
            in_specs=[
                pl.BlockSpec(memory_space=pltpu.MemorySpace.SMEM),  # weights (9,)
                pl.BlockSpec(memory_space=pltpu.MemorySpace.SMEM),  # bias    (1,)
                pl.BlockSpec((Nb, L), lambda n: (n, 0)),
            ],
            out_specs=pl.BlockSpec((Nb, L), lambda n: (n, 0)),
        ),
        compiler_params=pltpu.CompilerParams(
            dimension_semantics=("parallel",)),
    )(w_flat, b, x)

    return out.reshape(N, 1, H, W)


def init_params(key):
    """Deterministic Conv2d(1,1,3,3) params (kaiming-uniform-like bounds)."""
    kw, kb = jax.random.split(key)
    fan_in = 1 * 3 * 3
    bound = 1.0 / jnp.sqrt(fan_in)
    weight = jax.random.uniform(kw, (3, 3), jnp.float32, -bound, bound)
    bias = jax.random.uniform(kb, (1,), jnp.float32, -bound, bound)
    return weight, bias


if __name__ == "__main__":
    key = jax.random.PRNGKey(0)
    k_x, k_p = jax.random.split(key)

    # Small shapes consistent with the module: N=2, C=1, H=W=16.
    x = jax.random.normal(k_x, (2, 1, 16, 16), jnp.float32)
    weight, bias = init_params(k_p)

    y = jax.block_until_ready(conv2d_3x3_same(x, weight, bias))

    # Reference check against XLA's conv (same semantics as torch Conv2d, padding=1).
    ref = lax.conv_general_dilated(
        x, weight.reshape(1, 1, 3, 3), window_strides=(1, 1), padding="SAME",
        dimension_numbers=("NCHW", "OIHW", "NCHW")) + bias[0]
    assert y.shape == (2, 1, 16, 16)
    assert jnp.allclose(y, ref, atol=1e-5, rtol=1e-5)

    print("KERNEL_OK")
</pallas_src>

<mosaic_0001>
module attributes {stable_mosaic.version = 11 : i64} {
  func.func @_conv3x3_kernel(%arg0: i32, %arg1: memref<9xf32, #tpu.memory_space<smem>>, %arg2: memref<1xf32, #tpu.memory_space<smem>>, %arg3: memref<2x256xf32, #tpu.memory_space<vmem>>, %arg4: memref<2x256xf32, #tpu.memory_space<vmem>>) attributes {dimension_semantics = [#tpu.dimension_semantics<parallel>], iteration_bounds = array<i64: 1>, scalar_prefetch = 0 : i64, scratch_operands = 0 : i64, tpu.core_type = #tpu.core_type<tc>, window_params = [{transform_indices = @transform_0, window_bounds = array<i64: 9>}, {transform_indices = @transform_1, window_bounds = array<i64: 1>}, {transform_indices = @transform_2, window_bounds = array<i64: 2, 256>}, {transform_indices = @transform_3, window_bounds = array<i64: 2, 256>}]} {
    %c0 = arith.constant 0 : index
    %c0_0 = arith.constant 0 : index
    %0 = vector.load %arg3[%c0, %c0_0] : memref<2x256xf32, #tpu.memory_space<vmem>>, vector<2x256xf32>
    %c0_1 = arith.constant 0 : index
    %1 = memref.load %arg1[%c0_1] : memref<9xf32, #tpu.memory_space<smem>>
    %c1 = arith.constant 1 : index
    %2 = memref.load %arg1[%c1] : memref<9xf32, #tpu.memory_space<smem>>
    %c2 = arith.constant 2 : index
    %3 = memref.load %arg1[%c2] : memref<9xf32, #tpu.memory_space<smem>>
    %c3 = arith.constant 3 : index
    %4 = memref.load %arg1[%c3] : memref<9xf32, #tpu.memory_space<smem>>
    %c4 = arith.constant 4 : index
    %5 = memref.load %arg1[%c4] : memref<9xf32, #tpu.memory_space<smem>>
    %c5 = arith.constant 5 : index
    %6 = memref.load %arg1[%c5] : memref<9xf32, #tpu.memory_space<smem>>
    %c6 = arith.constant 6 : index
    %7 = memref.load %arg1[%c6] : memref<9xf32, #tpu.memory_space<smem>>
    %c7 = arith.constant 7 : index
    %8 = memref.load %arg1[%c7] : memref<9xf32, #tpu.memory_space<smem>>
    %c8 = arith.constant 8 : index
    %9 = memref.load %arg1[%c8] : memref<9xf32, #tpu.memory_space<smem>>
    %c0_2 = arith.constant 0 : index
    %10 = memref.load %arg2[%c0_2] : memref<1xf32, #tpu.memory_space<smem>>
    %11 = tpu.iota {dimensions = array<i32: 1>} : vector<2x256xi32>
    %c16_i32 = arith.constant 16 : i32
    %c0_i32 = arith.constant 0 : i32
    %12 = arith.cmpi eq, %c16_i32, %c0_i32 : i32
    %c1_i32 = arith.constant 1 : i32
    %13 = arith.select %12, %c1_i32, %c16_i32 : i32
    %14 = vector.broadcast %13 : i32 to vector<2x256xi32>
    %15 = arith.remsi %11, %14 : vector<2x256xi32>
    %c0_i32_3 = arith.constant 0 : i32
    %16 = vector.broadcast %c0_i32_3 : i32 to vector<2x256xi32>
    %17 = arith.cmpi ne, %15, %16 : vector<2x256xi32>
    %c0_i32_4 = arith.constant 0 : i32
    %18 = vector.broadcast %c0_i32_4 : i32 to vector<2x256xi32>
    %19 = arith.cmpi slt, %15, %18 : vector<2x256xi32>
    %c0_i32_5 = arith.constant 0 : i32
    %20 = arith.cmpi slt, %13, %c0_i32_5 : i32
    %21 = vector.broadcast %20 : i1 to vector<2x256xi1>
    %22 = vector.broadcast %21 : vector<2x256xi1> to vector<2x256xi1>
    %23 = arith.xori %19, %22 : vector<2x256xi1>
    %24 = arith.andi %23, %17 : vector<2x256xi1>
    %25 = vector.broadcast %13 : i32 to vector<2x256xi32>
    %26 = arith.addi %15, %25 : vector<2x256xi32>
    %27 = arith.select %24, %26, %15 : vector<2x256xi1>, vector<2x256xi32>
    %cst = arith.constant 0.000000e+00 : f32
    %28 = vector.broadcast %cst : f32 to vector<2x256xf32>
    %c1_i32_6 = arith.constant 1 : i32
    %29 = vector.broadcast %c1_i32_6 : i32 to vector<2x256xi32>
    %30 = arith.cmpi sge, %27, %29 : vector<2x256xi32>
    %c1_i32_7 = arith.constant 1 : i32
    %31 = tpu.dynamic_rotate %0 by %c1_i32_7 dim 1 : vector<2x256xf32>, i32 -> vector<2x256xf32>
    %32 = arith.select %30, %31, %28 : vector<2x256xi1>, vector<2x256xf32>
    %c14_i32 = arith.constant 14 : i32
    %33 = vector.broadcast %c14_i32 : i32 to vector<2x256xi32>
    %34 = arith.cmpi sle, %27, %33 : vector<2x256xi32>
    %c255_i32 = arith.constant 255 : i32
    %35 = tpu.dynamic_rotate %0 by %c255_i32 dim 1 : vector<2x256xf32>, i32 -> vector<2x256xf32>
    %36 = arith.select %34, %35, %28 : vector<2x256xi1>, vector<2x256xf32>
    %37 = vector.broadcast %1 : f32 to vector<2x256xf32>
    %38 = arith.mulf %37, %32 : vector<2x256xf32>
    %39 = vector.broadcast %2 : f32 to vector<2x256xf32>
    %40 = arith.mulf %39, %0 : vector<2x256xf32>
    %41 = arith.addf %38, %40 : vector<2x256xf32>
    %42 = vector.broadcast %3 : f32 to vector<2x256xf32>
    %43 = arith.mulf %42, %36 : vector<2x256xf32>
    %44 = arith.addf %41, %43 : vector<2x256xf32>
    %45 = vector.broadcast %4 : f32 to vector<2x256xf32>
    %46 = arith.mulf %45, %32 : vector<2x256xf32>
    %47 = vector.broadcast %5 : f32 to vector<2x256xf32>
    %48 = arith.mulf %47, %0 : vector<2x256xf32>
    %49 = vector.broadcast %10 : f32 to vector<2x256xf32>
    %50 = arith.addf %48, %49 : vector<2x256xf32>
    %51 = arith.addf %46, %50 : vector<2x256xf32>
    %52 = vector.broadcast %6 : f32 to vector<2x256xf32>
    %53 = arith.mulf %52, %36 : vector<2x256xf32>
    %54 = arith.addf %51, %53 : vector<2x256xf32>
    %55 = vector.broadcast %7 : f32 to vector<2x256xf32>
    %56 = arith.mulf %55, %32 : vector<2x256xf32>
    %57 = vector.broadcast %8 : f32 to vector<2x256xf32>
    %58 = arith.mulf %57, %0 : vector<2x256xf32>
    %59 = arith.addf %56, %58 : vector<2x256xf32>
    %60 = vector.broadcast %9 : f32 to vector<2x256xf32>
    %61 = arith.mulf %60, %36 : vector<2x256xf32>
    %62 = arith.addf %59, %61 : vector<2x256xf32>
    %c16_i32_8 = arith.constant 16 : i32
    %63 = vector.broadcast %c16_i32_8 : i32 to vector<2x256xi32>
    %64 = arith.cmpi sge, %11, %63 : vector<2x256xi32>
    %c16_i32_9 = arith.constant 16 : i32
    %65 = tpu.dynamic_rotate %44 by %c16_i32_9 dim 1 : vector<2x256xf32>, i32 -> vector<2x256xf32>
    %66 = arith.select %64, %65, %28 : vector<2x256xi1>, vector<2x256xf32>
    %67 = arith.addf %54, %66 : vector<2x256xf32>
    %c240_i32 = arith.constant 240 : i32
    %68 = vector.broadcast %c240_i32 : i32 to vector<2x256xi32>
    %69 = arith.cmpi slt, %11, %68 : vector<2x256xi32>
    %c240_i32_10 = arith.constant 240 : i32
    %70 = tpu.dynamic_rotate %62 by %c240_i32_10 dim 1 : vector<2x256xf32>, i32 -> vector<2x256xf32>
    %71 = arith.select %69, %70, %28 : vector<2x256xi1>, vector<2x256xf32>
    %72 = arith.addf %67, %71 : vector<2x256xf32>
    %c0_11 = arith.constant 0 : index
    %c0_12 = arith.constant 0 : index
    %73 = vector.load %arg4[%c0_11, %c0_12] : memref<2x256xf32, #tpu.memory_space<vmem>>, vector<2x256xf32>
    tpu.vector_store %arg4[%c0_11, %c0_12], %72 {strides = array<i32>} : memref<2x256xf32, #tpu.memory_space<vmem>>, vector<2x256xf32>,
    return
  }
  func.func @transform_0(%arg0: i32) -> i32 {
    %c0_i32 = arith.constant 0 : i32
    %c0_i32_0 = arith.constant 0 : i32
    return %c0_i32 : i32
  }
  func.func @transform_1(%arg0: i32) -> i32 {
    %c0_i32 = arith.constant 0 : i32
    %c0_i32_0 = arith.constant 0 : i32
    return %c0_i32 : i32
  }
  func.func @transform_2(%arg0: i32) -> (i32, i32) {
    %c0_i32 = arith.constant 0 : i32
    %c0_i32_0 = arith.constant 0 : i32
    return %arg0, %c0_i32 : i32, i32
  }
  func.func @transform_3(%arg0: i32) -> (i32, i32) {
    %c0_i32 = arith.constant 0 : i32
    %c0_i32_0 = arith.constant 0 : i32
    return %arg0, %c0_i32 : i32, i32
  }
}

</mosaic_0001>

<llo_original>
// kernel: tpu_custom_call.1
$region0: #{tpu_custom_call.1}
  #allocation0 [shape = 'u32[]', space=smem, size = 0x4, offset = 0x4, fixed_abs, tag = 'smem constant byte address 0x4 - core index']
  #allocation1 [shape = 'u32[144,128]{1,0:T(1,128)}', space=vmem, size = 0x12000, scoped, tag = 'internal scratch']
  #allocation2 [shape = 'f32[1]{0:T(128)S(6)}', space=smem, size = 0x200, scoped, tag = 'scoped memory for tpu_custom_call.1']
  %s0 = inlined_call_operand.vmem [shape: f32[9], index: 0, kind: input, shape index: {}]
  %s1 = inlined_call_operand.<no memory space> [shape: f32[1], index: 1, kind: input, shape index: {}]
  %s2 = inlined_call_operand.hbm [shape: f32[2,256], index: 2, kind: input, shape index: {}]
  %s3 = inlined_call_operand.hbm [shape: f32[2,256], index: 3, kind: output, shape index: {}]
  %s4 = sld [smem:[#allocation0]]
  $region30: #{tpu_custom_call.1} parent=0
    _
  %s6 = ssub.s32 1, %s4
  %s7 = scalar_select 0, %s6, %s4
  %8 = sst [smem:[#allocation2]] %s1
  $region1: #{tpu_custom_call.1} parent=0
    #allocation3 [shape = 'u8[512]{0}', space=smem, size = 0x200, scoped, tag = 'input window, operand 0, single buffered']
    #allocation4 [shape = 's32[1]{0}', space=sflag, size = 0x4, scoped, tag = 'scoped memory for tpu_custom_call.1']
    #allocation5 [shape = 's32[1]{0}', space=sflag, size = 0x4, scoped, tag = 'scoped memory for tpu_custom_call.1']
    #allocation6 [shape = 's32[1]{0}', space=sflag, size = 0x4, scoped, tag = 'scoped memory for tpu_custom_call.1']
    #allocation7 [shape = 'u8[2048]{0}', space=vmem, size = 0x800, scoped, tag = 'input window, operand 2, single buffered']
    #allocation8 [shape = 'u8[2048]{0}', space=vmem, size = 0x800, scoped, tag = 'output window, operand 0, single buffered']
    %9 = vsyncpa [#allocation6], 0
    %10 = vsyncpa [#allocation4], 0
    %11 = vsyncpa [#allocation5], 0
    // Predicated region
    $region2: #{tpu_custom_call.1} parent=1 // pred_check
      _
    $region3: #{tpu_custom_call.1} parent=1 // pred_check_branch
      %13 = sbr.rel (0) target = $region5
    $region4: #{tpu_custom_call.1} parent=1 // pred_region
      %s15 = ssub.s32 16, 16
      %16 = vsyncadd [#allocation6], %s15
      %s18 = sshll.u32 %s0, 4
      %s19 = int_to_ptr.vmem [resolvable:$true] %s18
      %21 = dma.vmem_to_smem %s19, 16, [#allocation3], [#allocation6]
    $region5: #{tpu_custom_call.1} parent=1 // pred_fallthru
      _
    // Predicated region
    $region6: #{tpu_custom_call.1} parent=1 // pred_check
      _
    $region7: #{tpu_custom_call.1} parent=1 // pred_check_branch
      %23 = sbr.rel (0) target = $region9
    $region8: #{tpu_custom_call.1} parent=1 // pred_region
      _
    $region9: #{tpu_custom_call.1} parent=1 // pred_fallthru
      _
    // Predicated region
    $region10: #{tpu_custom_call.1} parent=1 // pred_check
      _
    $region11: #{tpu_custom_call.1} parent=1 // pred_check_branch
      %25 = sbr.rel (0) target = $region13
    $region12: #{tpu_custom_call.1} parent=1 // pred_region
      %s27 = ssub.s32 64, 64
      %28 = vsyncadd [#allocation4], %s27
      %s30 = sshll.u32 [#allocation7], 4
      %s31 = int_to_ptr.vmem [resolvable:$true] %s30
      %33 = dma.hbm_to_vmem [thread:$0]  %s2, 64, %s31, [#allocation4]
    $region13: #{tpu_custom_call.1} parent=1 // pred_fallthru
      _
    // Predicated region
    $region14: #{tpu_custom_call.1} parent=1 // pred_check
      _
    $region15: #{tpu_custom_call.1} parent=1 // pred_check_branch
      %35 = sbr.rel (0) target = $region17
    $region16: #{tpu_custom_call.1} parent=1 // pred_region
      %36 = dma.done [#allocation6], 16
    $region17: #{tpu_custom_call.1} parent=1 // pred_fallthru
      _
    // Predicated region
    $region18: #{tpu_custom_call.1} parent=1 // pred_check
      _
    $region19: #{tpu_custom_call.1} parent=1 // pred_check_branch
      %38 = sbr.rel (0) target = $region21
    $region20: #{tpu_custom_call.1} parent=1 // pred_region
      %39 = dma.done [#allocation4], 64
    $region21: #{tpu_custom_call.1} parent=1 // pred_fallthru
      _
    %40 = sfence
    %v41 = vld [vmem:[#allocation7] sm:$0xf]
    %s42 = sld [smem:[#allocation3]]
    %s43 = sld [smem:[#allocation3 + $0x1]]
    %s44 = sld [smem:[#allocation3 + $0x2]]
    %s45 = sld [smem:[#allocation3 + $0x3]]
    %s46 = sld [smem:[#allocation3 + $0x4]]
    %s47 = sld [smem:[#allocation3 + $0x5]]
    %s48 = sld [smem:[#allocation3 + $0x6]]
    %s49 = sld [smem:[#allocation3 + $0x7]]
    %s50 = sld [smem:[#allocation3 + $0x8]]
    %s51 = sld [smem:[#allocation2]]
    %v52 = vlaneseq
    %v53 = vand.u32 %v52, 127
    %v54 = vadd.s32 %v53, 128
    %vm55 = vcmp.lt.s32.totalorder %v53, 0
    %v56 = vsub.s32 0, %v53
    %v57 = vsel %vm55, %v56, %v53
    %v58 = vshrl.u32 %v57, 4
    %v59 = vand.u32 %v57, 15
    %v60 = vsub.s32 0, %v59
    %v61 = vsel %vm55, %v60, %v59
    %vm62 = vcmp.lt.s32.totalorder %v54, 0
    %v63 = vsub.s32 0, %v54
    %v64 = vsel %vm62, %v63, %v54
    %v65 = vshrl.u32 %v64, 4
    %v66 = vand.u32 %v64, 15
    %v67 = vsub.s32 0, %v66
    %v68 = vsel %vm62, %v67, %v66
    %vm69 = vcmp.ne.s32.totalorder %v61, 0
    %vm70 = vcmp.ne.s32.totalorder %v68, 0
    %vm71 = vcmp.lt.s32.totalorder %v61, 0
    %vm72 = vcmp.lt.s32.totalorder %v68, 0
    %vm73 = vmand %vm71, %vm69
    %vm74 = vmand %vm72, %vm70
    %v75 = vadd.s32 %v61, 16
    %v76 = vadd.s32 %v68, 16
    %v77 = vsel %vm73, %v75, %v61
    %v78 = vsel %vm74, %v76, %v68
    %vm79 = vcmp.ge.s32.totalorder %v77, 1
    %vm80 = vcmp.ge.s32.totalorder %v78, 1
    %v83 = vunpack.c.l.s4 1983009808
    %v84 = vunpack.c.0.s8 %v83
    %v85 = vlaneseq
    %v86 = vshrl.u32 %v85, 7
    %v87 = vsub.s32 %v84, %v86
    %v88 = vrot.slane %v41, %v87
    %v89 = vcombine.high %v88, %v88
    %92 = vrot.lane.b32.xlu0 %v88, 1
    %v93 = vpop.permute.xlu0 %92
    %94 = vrot.lane.b32.xlu0 %v89, 1
    %v95 = vpop.permute.xlu0 %94
    %vm96 = vcmp.lt.s32.totalorder %v53, 1
    %v97 = vsel %vm96, %v93, %v95
    %v98 = vsel %vm96, %v95, %v93
    %v99 = vsel %vm79, %v98, 0.0
    %v100 = vsel %vm80, %v97, 0.0
    %vm101 = vcmp.le.s32.totalorder %v77, 14
    %vm102 = vcmp.le.s32.totalorder %v78, 14
    %103 = vrot.lane.b32.xlu0 %v88, 127
    %v104 = vpop.permute.xlu0 %103
    %105 = vrot.lane.b32.xlu0 %v89, 127
    %v106 = vpop.permute.xlu0 %105
    %vm107 = vcmp.lt.s32.totalorder %v53, 127
    %v108 = vsel %vm107, %v104, %v106
    %v109 = vsel %vm107, %v106, %v104
    %v110 = vsel %vm101, %v108, 0.0
    %v111 = vsel %vm102, %v109, 0.0
    %v112 = vstv %s42
    %v113 = vmul.f32 %v112, %v99
    %v114 = vmul.f32 %v112, %v100
    %v115 = vstv %s43
    %v116 = vmul.f32 %v115, %v41
    %v119 = vunpack.c.l.s4 1983009808
    %v120 = vunpack.c.0.s8 %v119
    %v121 = vlaneseq
    %v122 = vshrl.u32 %v121, 7
    %v123 = vsub.s32 %v120, %v122
    %v124 = vrot.slane %v116, %v123
    %v125 = vcombine.high %v124, %v124
    %v128 = vadd.f32 %v113, %v124
    %v129 = vadd.f32 %v114, %v125
    %v130 = vstv %s44
    %v131 = vmul.f32 %v130, %v110
    %v132 = vmul.f32 %v130, %v111
    %v133 = vadd.f32 %v128, %v131
    %v134 = vadd.f32 %v129, %v132
    %v135 = vstv %s45
    %v136 = vmul.f32 %v135, %v99
    %v137 = vmul.f32 %v135, %v100
    %v138 = vstv %s46
    %v139 = vmul.f32 %v138, %v41
    %v140 = vstv %s51
    %v141 = vadd.f32 %v139, %v140
    %v144 = vunpack.c.l.s4 1983009808
    %v145 = vunpack.c.0.s8 %v144
    %v146 = vlaneseq
    %v147 = vshrl.u32 %v146, 7
    %v148 = vsub.s32 %v145, %v147
    %v149 = vrot.slane %v141, %v148
    %v150 = vcombine.high %v149, %v149
    %v153 = vadd.f32 %v136, %v149
    %v154 = vadd.f32 %v137, %v150
    %v155 = vstv %s47
    %v156 = vmul.f32 %v155, %v110
    %v157 = vmul.f32 %v155, %v111
    %v158 = vadd.f32 %v153, %v156
    %v159 = vadd.f32 %v154, %v157
    %v160 = vstv %s48
    %v161 = vmul.f32 %v160, %v99
    %v162 = vmul.f32 %v160, %v100
    %v163 = vstv %s49
    %v164 = vmul.f32 %v163, %v41
    %v167 = vunpack.c.l.s4 1983009808
    %v168 = vunpack.c.0.s8 %v167
    %v169 = vlaneseq
    %v170 = vshrl.u32 %v169, 7
    %v171 = vsub.s32 %v168, %v170
    %v172 = vrot.slane %v164, %v171
    %v173 = vcombine.high %v172, %v172
    %v176 = vadd.f32 %v161, %v172
    %v177 = vadd.f32 %v162, %v173
    %v178 = vstv %s50
    %v179 = vmul.f32 %v178, %v110
    %v180 = vmul.f32 %v178, %v111
    %v181 = vadd.f32 %v176, %v179
    %v182 = vadd.f32 %v177, %v180
    %vm183 = vcmp.ge.s32.totalorder %v53, 16
    %vm184 = vcmp.ge.s32.totalorder %v54, 16
    %185 = vrot.lane.b32.xlu0 %v133, 16
    %v186 = vpop.permute.xlu0 %185
    %187 = vrot.lane.b32.xlu0 %v134, 16
    %v188 = vpop.permute.xlu0 %187
    %vm189 = vcmp.lt.s32.totalorder %v53, 16
    %v190 = vsel %vm189, %v186, %v188
    %v191 = vsel %vm189, %v188, %v186
    %v192 = vsel %vm183, %v191, 0.0
    %v193 = vsel %vm184, %v190, 0.0
    %v194 = vadd.f32 %v158, %v192
    %v195 = vadd.f32 %v159, %v193
    %vm196 = vcmp.lt.s32.totalorder %v53, 240
    %vm197 = vcmp.lt.s32.totalorder %v54, 240
    %198 = vrot.lane.b32.xlu0 %v181, 112
    %v199 = vpop.permute.xlu0 %198
    %200 = vrot.lane.b32.xlu0 %v182, 112
    %v201 = vpop.permute.xlu0 %200
    %vm202 = vcmp.lt.s32.totalorder %v53, 112
    %v203 = vsel %vm202, %v199, %v201
    %v204 = vsel %vm202, %v201, %v199
    %v205 = vsel %vm196, %v203, 0.0
    %v206 = vsel %vm197, %v204, 0.0
    %v207 = vadd.f32 %v194, %v205
    %v208 = vadd.f32 %v195, %v206
    %v211 = vcombine.low %v207, %v208
    %v213 = vunpack.c.l.s4 1983009808
    %v214 = vunpack.c.0.s8 %v213
    %v215 = vlaneseq
    %v216 = vshrl.u32 %v215, 7
    %v217 = vsub.s32 %v214, %v216
    %v218 = vrot.slane %v211, %v217
    %220 = vst [vmem:[#allocation8] sm:$0xf] %v218
    // Predicated region
    $region22: #{tpu_custom_call.1} parent=1 // pred_check
      _
    $region23: #{tpu_custom_call.1} parent=1 // pred_check_branch
      %222 = sbr.rel (0) target = $region25
    $region24: #{tpu_custom_call.1} parent=1 // pred_region
      %s224 = ssub.s32 64, 64
      %225 = vsyncadd [#allocation5], %s224
      %s227 = sshll.u32 [#allocation8], 4
      %s228 = int_to_ptr.vmem [resolvable:$true] %s227
      %230 = dma.vmem_to_hbm [thread:$0]  %s228, 64, %s3, [#allocation5]
    $region25: #{tpu_custom_call.1} parent=1 // pred_fallthru
      _
    // Predicated region
    $region26: #{tpu_custom_call.1} parent=1 // pred_check
      _
    $region27: #{tpu_custom_call.1} parent=1 // pred_check_branch
      %232 = sbr.rel (0) target = $region29
    $region28: #{tpu_custom_call.1} parent=1 // pred_region
      %233 = dma.done [#allocation5], 64
    $region29: #{tpu_custom_call.1} parent=1 // pred_fallthru
      _
    %234 = vsyncpa [#allocation4], 1
    %235 = vsyncpa [#allocation5], 1
    %236 = vsyncpa [#allocation6], 1

</llo_original>
